<compile_context>
chip_gen: v7x
topology: tpu7x:2x2x1
jax: 0.10.0
libtpu: 0.0.40
codegen_flags: <defaults>
</compile_context>

<pallas_src>
import functools

import jax
import jax.numpy as jnp
from jax.experimental import pallas as pl
from jax.experimental.pallas import tpu as pltpu

_LANE = 128


def _round_up(x, m):
    return ((x + m - 1) // m) * m


def _predictor_kernel(x_ref, w_ref, mask_ref, type_ref, time_ref, *, num_types):
    # x_ref:    (TM, dim)        f32  streamed (cast to bf16 here, on the VPU)
    # w_ref:    (dim, N_pad)     bf16 resident across the grid (index_map -> (0,0))
    # mask_ref: (TM, 1)          f32  streamed
    # type_ref: (TM, num_types)  f32  streamed (narrow, full last dim -> legal block)
    # time_ref: (TM, 1)          f32  streamed
    x = x_ref[...].astype(jnp.bfloat16)
    acc = jnp.dot(x, w_ref[...], preferred_element_type=jnp.float32)  # (TM, N_pad) f32
    masked = acc * mask_ref[...]                                      # VPU broadcast-mul
    type_ref[...] = masked[:, :num_types]
    time_ref[...] = masked[:, num_types:num_types + 1]


def prepare_fused_predictor_weight(w_type, w_time):
    """One-time prep (outside the hot path).

    w_type: (num_types, dim) f32, PyTorch nn.Linear layout.
    w_time: (1, dim)         f32, PyTorch nn.Linear layout.
    Returns (dim, N_pad) bf16 slab: [W_type^T | W_time^T | zero-pad to 128].
    N_pad is deliberately kept at 128 (HBM-bound kernel; wider would only add
    zero-column writeback on v6e/v7x for zero compute benefit).
    """
    num_types, dim = w_type.shape
    n_total = num_types + w_time.shape[0]
    n_pad = max(_LANE, _round_up(n_total, _LANE))
    w_cat = jnp.concatenate([w_type, w_time], axis=0)          # (n_total, dim)
    w_slab = jnp.zeros((dim, n_pad), dtype=jnp.bfloat16)
    w_slab = w_slab.at[:, :n_total].set(w_cat.T.astype(jnp.bfloat16))
    return w_slab


def _choose_tm(m, requested):
    """Multiple of 8, capped so the grid keeps >= 2 steps whenever possible
    (v7x megacore sharding + DMA/compute overlap)."""
    tm = max(8, _round_up(min(requested, m), 8))
    if m > 8 and pl.cdiv(m, tm) < 2:
        tm = max(8, _round_up(pl.cdiv(m, 2), 8))
    return tm


def fused_predictor_forward(data, w_slab, non_pad_mask, num_types, *, tm=1024):
    """data: (B, S, dim) f32 enc_output; w_slab from prepare_fused_predictor_weight;
    non_pad_mask: (B, S, 1) f32.
    Returns (type_prediction (B,S,num_types) f32, time_prediction (B,S,1) f32)."""
    B, S, dim = data.shape
    n_pad = w_slab.shape[1]
    M = B * S

    tm = _choose_tm(M, tm)
    grid = (pl.cdiv(M, tm),)          # ragged last tile: Pallas masks OOB stores

    x2d = data.reshape(M, dim)                                # stays f32; no cast pass
    mask2d = non_pad_mask.reshape(M, 1).astype(jnp.float32)

    # Advisory cost for the XLA scheduler (small, purely mem-bound custom call).
    bytes_accessed = (M * dim * 4 + dim * n_pad * 2 + M * 4          # reads
                      + M * num_types * 4 + M * 4)                   # writes
    cost = pl.CostEstimate(flops=2 * M * dim * n_pad,
                           transcendentals=0,
                           bytes_accessed=bytes_accessed)

    # Double-buffered streams + resident weight slab. Only raise the scoped-VMEM
    # limit when the footprint would exceed the per-generation defaults
    # (v5e: 16 MiB, v6e/v7x: 32 MiB scoped).
    vmem_bytes = (2 * (tm * dim * 4 + tm * 4 + tm * num_types * 4 + tm * 4)
                  + dim * n_pad * 2)
    vmem_limit = None
    if vmem_bytes > 12 * 1024 * 1024:
        vmem_limit = min(int(vmem_bytes * 3 // 2), 96 * 1024 * 1024)

    type_out, time_out = pl.pallas_call(
        functools.partial(_predictor_kernel, num_types=num_types),
        out_shape=(jax.ShapeDtypeStruct((M, num_types), jnp.float32),
                   jax.ShapeDtypeStruct((M, 1), jnp.float32)),
        grid_spec=pltpu.PrefetchScalarGridSpec(
            num_scalar_prefetch=0,
            grid=grid,
            in_specs=[
                pl.BlockSpec((tm, dim), lambda i: (i, 0)),      # streamed activations (f32)
                pl.BlockSpec((dim, n_pad), lambda i: (0, 0)),   # resident weight slab (bf16)
                pl.BlockSpec((tm, 1), lambda i: (i, 0)),        # streamed pad mask
            ],
            out_specs=[
                pl.BlockSpec((tm, num_types), lambda i: (i, 0)),  # narrow type logits
                pl.BlockSpec((tm, 1), lambda i: (i, 0)),          # narrow time pred
            ],
        ),
        compiler_params=pltpu.CompilerParams(
            dimension_semantics=("parallel",),   # shard M across TCs on v7x
            vmem_limit_bytes=vmem_limit,
        ),
        cost_estimate=cost,
    )(x2d, w_slab, mask2d)

    type_pred = type_out.reshape(B, S, num_types)
    time_pred = time_out.reshape(B, S, 1)
    return type_pred, time_pred


def predictor_reference(data, weight, non_pad_mask):
    # Pure-JAX f32 reference of the PyTorch Predictor forward.
    return jnp.einsum("bsd,td->bst", data, weight) * non_pad_mask


if __name__ == "__main__":
    # Small shapes consistent with the module: batch=2, seq=8, d_model=32, num_types=16.
    B, S, DIM, NUM_TYPES = 2, 8, 32, 16

    key = jax.random.PRNGKey(0)
    k_data, k_wtype, k_wtime, k_type = jax.random.split(key, 4)

    # Event types (0 = padding) -> non_pad_mask exactly as get_non_pad_mask does.
    event_type = jax.random.randint(k_type, (B, S), 0, NUM_TYPES + 1)
    non_pad_mask = (event_type != 0).astype(jnp.float32)[..., None]   # (B, S, 1)

    # Encoder output stand-in (Mamba encoder not translated; see TODO at top).
    enc_output = jax.random.normal(k_data, (B, S, DIM), dtype=jnp.float32)

    # Xavier-normal init for the two Predictor linears (PyTorch (out, in) layout).
    std_type = (2.0 / (DIM + NUM_TYPES)) ** 0.5
    w_type = std_type * jax.random.normal(k_wtype, (NUM_TYPES, DIM), dtype=jnp.float32)
    std_time = (2.0 / (DIM + 1)) ** 0.5
    w_time = std_time * jax.random.normal(k_wtime, (1, DIM), dtype=jnp.float32)

    # One-time weight prep (fused + padded + transposed + bf16), then the hot path.
    w_slab = prepare_fused_predictor_weight(w_type, w_time)
    type_pred, time_pred = fused_predictor_forward(
        enc_output, w_slab, non_pad_mask, NUM_TYPES)
    type_pred, time_pred = jax.block_until_ready((type_pred, time_pred))

    ref_type = predictor_reference(enc_output, w_type, non_pad_mask)
    ref_time = predictor_reference(enc_output, w_time, non_pad_mask)

    assert type_pred.shape == (B, S, NUM_TYPES)
    assert time_pred.shape == (B, S, 1)
    # bf16 matmul with f32 accumulation -> loosened tolerance vs f32 reference.
    assert jnp.allclose(type_pred, ref_type, atol=5e-2, rtol=5e-2)
    assert jnp.allclose(time_pred, ref_time, atol=5e-2, rtol=5e-2)
    # Masked (padding) positions must be exactly zero.
    assert jnp.allclose(type_pred * (1.0 - non_pad_mask), 0.0)
    assert jnp.allclose(time_pred * (1.0 - non_pad_mask), 0.0)

    print("KERNEL_OK")
</pallas_src>

<mosaic_0001>
module attributes {stable_mosaic.version = 11 : i64} {
  func.func @_predictor_kernel(%arg0: i32, %arg1: memref<8x32xf32, #tpu.memory_space<vmem>>, %arg2: memref<32x128xbf16, #tpu.memory_space<vmem>>, %arg3: memref<8x1xf32, #tpu.memory_space<vmem>>, %arg4: memref<8x16xf32, #tpu.memory_space<vmem>>, %arg5: memref<8x1xf32, #tpu.memory_space<vmem>>) attributes {dimension_semantics = [#tpu.dimension_semantics<parallel>], iteration_bounds = array<i64: 2>, scalar_prefetch = 0 : i64, scratch_operands = 0 : i64, tpu.core_type = #tpu.core_type<tc>, window_params = [{transform_indices = @transform_0, window_bounds = array<i64: 8, 32>}, {pipeline_mode = #tpu.pipeline_mode<synchronous>, transform_indices = @transform_1, window_bounds = array<i64: 32, 128>}, {transform_indices = @transform_2, window_bounds = array<i64: 8, 1>}, {transform_indices = @transform_3, window_bounds = array<i64: 8, 16>}, {transform_indices = @transform_4, window_bounds = array<i64: 8, 1>}]} {
    %c0 = arith.constant 0 : index
    %c0_0 = arith.constant 0 : index
    %0 = vector.load %arg1[%c0, %c0_0] : memref<8x32xf32, #tpu.memory_space<vmem>>, vector<8x32xf32>
    %1 = arith.truncf %0 : vector<8x32xf32> to vector<8x32xbf16>
    %c0_1 = arith.constant 0 : index
    %c0_2 = arith.constant 0 : index
    %2 = vector.load %arg2[%c0_1, %c0_2] : memref<32x128xbf16, #tpu.memory_space<vmem>>, vector<32x128xbf16>
    %cst = arith.constant dense<0.000000e+00> : vector<8x128xf32>
    %3 = tpu.matmul %1, %2, %cst {dimension_numbers = #tpu.dot_dimension_numbers<[1], [0], [0], [1], [0, 0, 1, 1], [], []>} : vector<8x32xbf16>, vector<32x128xbf16>, vector<8x128xf32> -> vector<8x128xf32>
    %c0_3 = arith.constant 0 : index
    %c0_4 = arith.constant 0 : index
    %4 = vector.load %arg3[%c0_3, %c0_4] : memref<8x1xf32, #tpu.memory_space<vmem>>, vector<8x1xf32>
    %5 = vector.broadcast %4 : vector<8x1xf32> to vector<8x128xf32>
    %6 = arith.mulf %3, %5 : vector<8x128xf32>
    %7 = vector.extract_strided_slice %6 {offsets = [0, 0], sizes = [8, 16], strides = [1, 1]} : vector<8x128xf32> to vector<8x16xf32>
    %c0_5 = arith.constant 0 : index
    %c0_6 = arith.constant 0 : index
    %8 = vector.load %arg4[%c0_5, %c0_6] : memref<8x16xf32, #tpu.memory_space<vmem>>, vector<8x16xf32>
    tpu.vector_store %arg4[%c0_5, %c0_6], %7 {strides = array<i32>} : memref<8x16xf32, #tpu.memory_space<vmem>>, vector<8x16xf32>,
    %9 = vector.extract_strided_slice %6 {offsets = [0, 16], sizes = [8, 1], strides = [1, 1]} : vector<8x128xf32> to vector<8x1xf32>
    %c0_7 = arith.constant 0 : index
    %c0_8 = arith.constant 0 : index
    %10 = vector.load %arg5[%c0_7, %c0_8] : memref<8x1xf32, #tpu.memory_space<vmem>>, vector<8x1xf32>
    tpu.vector_store %arg5[%c0_7, %c0_8], %9 {strides = array<i32>} : memref<8x1xf32, #tpu.memory_space<vmem>>, vector<8x1xf32>,
    return
  }
  func.func @transform_0(%arg0: i32) -> (i32, i32) {
    %c0_i32 = arith.constant 0 : i32
    %c0_i32_0 = arith.constant 0 : i32
    return %arg0, %c0_i32 : i32, i32
  }
  func.func @transform_1(%arg0: i32) -> (i32, i32) {
    %c0_i32 = arith.constant 0 : i32
    %c0_i32_0 = arith.constant 0 : i32
    %c0_i32_1 = arith.constant 0 : i32
    return %c0_i32, %c0_i32_0 : i32, i32
  }
  func.func @transform_2(%arg0: i32) -> (i32, i32) {
    %c0_i32 = arith.constant 0 : i32
    %c0_i32_0 = arith.constant 0 : i32
    return %arg0, %c0_i32 : i32, i32
  }
  func.func @transform_3(%arg0: i32) -> (i32, i32) {
    %c0_i32 = arith.constant 0 : i32
    %c0_i32_0 = arith.constant 0 : i32
    return %arg0, %c0_i32 : i32, i32
  }
  func.func @transform_4(%arg0: i32) -> (i32, i32) {
    %c0_i32 = arith.constant 0 : i32
    %c0_i32_0 = arith.constant 0 : i32
    return %arg0, %c0_i32 : i32, i32
  }
}

</mosaic_0001>

<llo_original>
// kernel: tpu_custom_call.1
$region0: #{tpu_custom_call.1}
  #allocation0 [shape = 'u32[]', space=smem, size = 0x4, offset = 0x4, fixed_abs, tag = 'smem constant byte address 0x4 - core index']
  #allocation1 [shape = 'u32[144,128]{1,0:T(1,128)}', space=vmem, size = 0x12000, scoped, tag = 'internal scratch']
  %s0 = inlined_call_operand.vmem [shape: f32[16,32], index: 0, kind: input, shape index: {}]
  %s1 = inlined_call_operand.hbm [shape: bf16[32,128], index: 1, kind: input, shape index: {}]
  %s2 = inlined_call_operand.vmem [shape: f32[16,1], index: 2, kind: input, shape index: {}]
  %s3 = inlined_call_operand.hbm [shape: f32[16,16], index: 3, kind: output, shape index: {0}]
  %s4 = inlined_call_operand.vmem [shape: f32[16,1], index: 4, kind: output, shape index: {1}]
  %5 = xla_tuple %s3, %s4
  %s6 = sld [smem:[#allocation0]]
  $region57: #{tpu_custom_call.1} parent=0
    _
  %s8 = ssub.s32 1, %s6
  %s9 = scalar_select 0, %s8, %s6
  $region1: #{tpu_custom_call.1} parent=0
    #allocation2 [shape = 'u8[8192]{0}', space=vmem, size = 0x2000, scoped, tag = 'input window, operand 1, single buffered']
    #allocation3 [shape = 's32[2]{0}', space=sflag, size = 0x8, scoped, tag = 'scoped memory for tpu_custom_call.1']
    #allocation4 [shape = 's32[2]{0}', space=sflag, size = 0x8, scoped, tag = 'scoped memory for tpu_custom_call.1']
    #allocation5 [shape = 'u8[8192]{0}', space=vmem, size = 0x2000, scoped, tag = 'output window, operand 0']
    %10 = vsyncpa [#allocation3], 0
    %11 = vsyncpa [#allocation4], 0
    %s12 = scalar_lea.sflag [#allocation4], 1
    %13 = vsyncpa %s12, 0
    loop: start=0, step=1, limit=4
    $region2: #{tpu_custom_call.1} parent=1 // loop_pre_header
      _
    $region3: #{tpu_custom_call.1} parent=1 // loop_header
      %s15 = sphi 0, %s19
      %p16 = scmp.ge.s32.totalorder %s15, 4
      %s25 = sphi 0, %s27
      %s28 = sphi 0, %s25
      %s29 = sphi 0, %s28
      %s45 = sphi 0, %s29
      %s49 = sphi 0, %s49
      %s51 = sphi 0, %s49
      %s52 = sphi 0, %s51
      %s66 = sphi 0, %s52
      %s72 = sphi 0, %s74
      %s75 = sphi 0, %s72
      %s76 = sphi 0, %s75
      %s92 = sphi 0, %s76
      %s98 = sphi 0, %s100
      %s101 = sphi 0, %s98
      %s102 = sphi 0, %s101
      %s118 = sphi 0, %s102
      %s124 = sphi 0, %s126
      %s127 = sphi 0, %s124
      %s128 = sphi 0, %s127
      %s144 = sphi 0, %s128
    $region4: #{tpu_custom_call.1} parent=1 // loop_header_branch
      %18 = sbr.rel (%p16) target = $region8
    $region5: #{tpu_custom_call.1} parent=1 // loop_body
      %s20 = ssub.s32 %s15, 1
      %s21 = ssub.s32 %s15, 2
      %s22 = sadd.s32 %s15, 1
      %s23 = ssub.s32 %s15, %s22
      %p24 = scmp.eq.s32.totalorder %s23, 0
      %s26 = sadd.s32 %s25, 1
      %s27 = scalar_select %p24, %s25, %s26
      %p30 = pneg %p24
      %p31 = scmp.eq.s32.totalorder %s15, 1
      %p32 = por %p30, %p31
      %p33 = scmp.ne.s32.totalorder %s25, %s28
      %p34 = scmp.eq.s32.totalorder %s15, 0
      %p35 = por %p33, %p34
      %p36 = scmp.ne.s32.totalorder %s25, %s28
      %p37 = scmp.eq.s32.totalorder %s20, 1
      %p38 = por %p36, %p37
      %p39 = scmp.ne.s32.totalorder %s28, %s29
      %p40 = scmp.eq.s32.totalorder %s20, 0
      %p41 = por %p39, %p40
      %p42 = scmp.ne.s32.totalorder %s28, %s29
      %p43 = scmp.eq.s32.totalorder %s21, 1
      %p44 = por %p42, %p43
      %p46 = scmp.ne.s32.totalorder %s29, %s45
      %p47 = scmp.eq.s32.totalorder %s21, 0
      %p48 = por %p46, %p47
      %s50 = sadd.s32 %s49, 1
      %p53 = scmp.eq.s32.totalorder %s15, 1
      %p54 = scmp.ne.s32.totalorder %s49, %s51
      %p55 = scmp.eq.s32.totalorder %s15, 0
      %p56 = por %p54, %p55
      %p57 = scmp.ne.s32.totalorder %s49, %s51
      %p58 = scmp.eq.s32.totalorder %s20, 1
      %p59 = por %p57, %p58
      %p60 = scmp.ne.s32.totalorder %s51, %s52
      %p61 = scmp.eq.s32.totalorder %s20, 0
      %p62 = por %p60, %p61
      %p63 = scmp.ne.s32.totalorder %s51, %s52
      %p64 = scmp.eq.s32.totalorder %s21, 1
      %p65 = por %p63, %p64
      %p67 = scmp.ne.s32.totalorder %s52, %s66
      %p68 = scmp.eq.s32.totalorder %s21, 0
      %p69 = por %p67, %p68
      %s70 = ssub.s32 %s15, %s22
      %p71 = scmp.eq.s32.totalorder %s70, 0
      %s73 = sadd.s32 %s72, 1
      %s74 = scalar_select %p71, %s72, %s73
      %p77 = pneg %p71
      %p78 = scmp.eq.s32.totalorder %s15, 1
      %p79 = por %p77, %p78
      %p80 = scmp.ne.s32.totalorder %s72, %s75
      %p81 = scmp.eq.s32.totalorder %s15, 0
      %p82 = por %p80, %p81
      %p83 = scmp.ne.s32.totalorder %s72, %s75
      %p84 = scmp.eq.s32.totalorder %s20, 1
      %p85 = por %p83, %p84
      %p86 = scmp.ne.s32.totalorder %s75, %s76
      %p87 = scmp.eq.s32.totalorder %s20, 0
      %p88 = por %p86, %p87
      %p89 = scmp.ne.s32.totalorder %s75, %s76
      %p90 = scmp.eq.s32.totalorder %s21, 1
      %p91 = por %p89, %p90
      %p93 = scmp.ne.s32.totalorder %s76, %s92
      %p94 = scmp.eq.s32.totalorder %s21, 0
      %p95 = por %p93, %p94
      %s96 = ssub.s32 %s15, %s22
      %p97 = scmp.eq.s32.totalorder %s96, 0
      %s99 = sadd.s32 %s98, 1
      %s100 = scalar_select %p97, %s98, %s99
      %p103 = pneg %p97
      %p104 = scmp.eq.s32.totalorder %s15, 1
      %p105 = por %p103, %p104
      %p106 = scmp.ne.s32.totalorder %s98, %s101
      %p107 = scmp.eq.s32.totalorder %s15, 0
      %p108 = por %p106, %p107
      %p109 = scmp.ne.s32.totalorder %s98, %s101
      %p110 = scmp.eq.s32.totalorder %s20, 1
      %p111 = por %p109, %p110
      %p112 = scmp.ne.s32.totalorder %s101, %s102
      %p113 = scmp.eq.s32.totalorder %s20, 0
      %p114 = por %p112, %p113
      %p115 = scmp.ne.s32.totalorder %s101, %s102
      %p116 = scmp.eq.s32.totalorder %s21, 1
      %p117 = por %p115, %p116
      %p119 = scmp.ne.s32.totalorder %s102, %s118
      %p120 = scmp.eq.s32.totalorder %s21, 0
      %p121 = por %p119, %p120
      %s122 = ssub.s32 %s15, %s22
      %p123 = scmp.eq.s32.totalorder %s122, 0
      %s125 = sadd.s32 %s124, 1
      %s126 = scalar_select %p123, %s124, %s125
      %p129 = pneg %p123
      %p130 = scmp.eq.s32.totalorder %s15, 1
      %p131 = por %p129, %p130
      %p132 = scmp.ne.s32.totalorder %s124, %s127
      %p133 = scmp.eq.s32.totalorder %s15, 0
      %p134 = por %p132, %p133
      %p135 = scmp.ne.s32.totalorder %s124, %s127
      %p136 = scmp.eq.s32.totalorder %s20, 1
      %p137 = por %p135, %p136
      %p138 = scmp.ne.s32.totalorder %s127, %s128
      %p139 = scmp.eq.s32.totalorder %s20, 0
      %p140 = por %p138, %p139
      %p141 = scmp.ne.s32.totalorder %s127, %s128
      %p142 = scmp.eq.s32.totalorder %s21, 1
      %p143 = por %p141, %p142
      %p145 = scmp.ne.s32.totalorder %s128, %s144
      %p146 = scmp.eq.s32.totalorder %s21, 0
      %p147 = por %p145, %p146
      %p148 = scmp.le.s32.totalorder 1, %s15
      %p149 = scmp.lt.s32.totalorder %s15, 3
      %p150 = pnand %p148, %p149
      %p151 = pneg %p150
      // Predicated region
      $region9: #{tpu_custom_call.1} parent=5 // pred_check
        _
      $region10: #{tpu_custom_call.1} parent=5 // pred_check_branch
        %153 = sbr.rel (%p150) target = $region12
      $region11: #{tpu_custom_call.1} parent=5 // pred_region
        %s154 = ssub.s32 %s15, 1
        // Predicated region
        $region13: #{tpu_custom_call.1} parent=11 // pred_check
          %p155 = pneg %p62
        $region14: #{tpu_custom_call.1} parent=11 // pred_check_branch
          %157 = sbr.rel (%p155) target = $region16
        $region15: #{tpu_custom_call.1} parent=11 // pred_region
          %s159 = ssub.s32 256, 256
          %160 = vsyncadd [#allocation3], %s159
          %s161 = sshll.u32 [#allocation2], 4
          %s162 = int_to_ptr.vmem [resolvable:$true] %s161
          %167 = dma.hbm_to_vmem [thread:$0]  %s1, 256, %s162, [#allocation3], 64, 64, 4
        $region16: #{tpu_custom_call.1} parent=11 // pred_fallthru
          _
      $region12: #{tpu_custom_call.1} parent=5 // pred_fallthru
        _
      %p168 = scmp.lt.s32.totalorder %s15, 2
      // Predicated region
      $region17: #{tpu_custom_call.1} parent=5 // pred_check
        %p169 = pneg %p168
      $region18: #{tpu_custom_call.1} parent=5 // pred_check_branch
        %171 = sbr.rel (%p169) target = $region20
      $region19: #{tpu_custom_call.1} parent=5 // pred_region
        // Predicated region
        $region21: #{tpu_custom_call.1} parent=19 // pred_check
          %p172 = pneg %p35
        $region22: #{tpu_custom_call.1} parent=19 // pred_check_branch
          %174 = sbr.rel (%p172) target = $region24
        $region23: #{tpu_custom_call.1} parent=19 // pred_region
          %p175 = scmp.lt.s32.totalorder %s15, 1
          %s176 = scalar_select %p175, %s15, 1
          %s177 = smul.addr %s176, 8
          %s178 = scalar_lea.vmem %s0, %s177
        $region24: #{tpu_custom_call.1} parent=19 // pred_fallthru
          _
        // Predicated region
        $region25: #{tpu_custom_call.1} parent=19 // pred_check
          %p179 = pneg %p82
        $region26: #{tpu_custom_call.1} parent=19 // pred_check_branch
          %181 = sbr.rel (%p179) target = $region28
        $region27: #{tpu_custom_call.1} parent=19 // pred_region
          %p182 = scmp.lt.s32.totalorder %s15, 1
          %s183 = scalar_select %p182, %s15, 1
          %s184 = smul.addr %s183, 8
          %s185 = scalar_lea.vmem %s2, %s184
        $region28: #{tpu_custom_call.1} parent=19 // pred_fallthru
          _
      $region20: #{tpu_custom_call.1} parent=5 // pred_fallthru
        _
      %p186 = scmp.le.s32.totalorder 1, %s15
      %p187 = scmp.lt.s32.totalorder %s15, 3
      %p188 = pnand %p186, %p187
      %p189 = pneg %p188
      // Predicated region
      $region29: #{tpu_custom_call.1} parent=5 // pred_check
        _
      $region30: #{tpu_custom_call.1} parent=5 // pred_check_branch
        %191 = sbr.rel (%p188) target = $region32
      $region31: #{tpu_custom_call.1} parent=5 // pred_region
        %s192 = ssub.s32 %s15, 1
        // Predicated region
        $region33: #{tpu_custom_call.1} parent=31 // pred_check
          %p193 = pneg %p62
        $region34: #{tpu_custom_call.1} parent=31 // pred_check_branch
          %195 = sbr.rel (%p193) target = $region36
        $region35: #{tpu_custom_call.1} parent=31 // pred_region
          %196 = dma.done [#allocation3], 256
        $region36: #{tpu_custom_call.1} parent=31 // pred_fallthru
          _
        %p197 = scmp.lt.s32.totalorder %s20, 1
        %s198 = scalar_select %p197, %s20, 1
        %s199 = smul.addr %s198, 8
        %s200 = scalar_lea.vmem %s0, %s199
        %p201 = pneg %p41
        %p202 = pneg %p38
        %p203 = pneg %p62
        %p204 = pneg %p59
        %p205 = scmp.lt.s32.totalorder %s20, 1
        %s206 = scalar_select %p205, %s20, 1
        %s207 = smul.addr %s206, 8
        %s208 = scalar_lea.vmem %s2, %s207
        %p209 = pneg %p88
        %p210 = pneg %p85
        %p211 = pneg %p114
        %p212 = pneg %p111
        %s213 = sand.u32 %s101, 1
        %s214 = scalar_lea.sflag [#allocation4], %s213
        %s215 = sand.u32 %s101, 1
        %s216 = smul.addr %s215, 8
        %s217 = scalar_lea.vmem [#allocation5], %s216
        %p218 = pneg %p140
        %p219 = pneg %p137
        %p220 = scmp.lt.s32.totalorder %s20, 1
        %s221 = scalar_select %p220, %s20, 1
        %s222 = smul.addr %s221, 8
        %s223 = scalar_lea.vmem %s4, %s222
        %p224 = scmp.lt.s32.totalorder %s20, 1
        %s225 = scalar_select %p224, %s20, 1
        %s226 = smul.addr %s225, 8
        %s227 = scalar_lea.vmem %s0, %s226
        %p228 = scmp.lt.s32.totalorder %s20, 1
        %s229 = scalar_select %p228, %s20, 1
        %s230 = smul.addr %s229, 8
        %s231 = scalar_lea.vmem %s2, %s230
        %p232 = scmp.lt.s32.totalorder %s20, 1
        %s233 = scalar_select %p232, %s20, 1
        %s234 = smul.addr %s233, 8
        %s235 = scalar_lea.vmem %s4, %s234
        %v237 = vld [vmem:[%s227] sm:$0xff]
        %v238 = vpack.c.bf16 %v237, %v237
        %v239 = vld [vmem:[#allocation2] sm:$0xf]
        %v240 = vld [vmem:[#allocation2 + $0x4] sm:$0xf]
        %v241 = vld [vmem:[#allocation2 + $0x8] sm:$0xf]
        %v242 = vld [vmem:[#allocation2 + $0xc] sm:$0xf]
        %v247 = vunpack.c.l.b16 %v239
        %v248 = vunpack.c.l.b16 %v240
        %v249 = vunpack.c.l.b16 %v241
        %v250 = vunpack.c.l.b16 %v242
        %v251 = vpack.c.b16 %v248, %v247
        %v252 = vpack.c.b16 %v250, %v249
        %vm255 = vcmask 261120
        %v257 = vsel %vm255, %v238, 0
        %259 = vmatprep.subr.bf16.mxu0 0
        %260 = vmatpush1.bf16.msra.mxu0 %v251
        %261 = vmatprep.subr.bf16.mxu0 0
        %262 = vmatpush1.bf16.msra.mxu0 %v252
        %263 = vmatprep.subr.bf16.mxu0 0
        %264 = vmatpush1.bf16.msra.mxu0 0
        %265 = vmatprep.subr.bf16.mxu0 0
        %266 = vmatpush1.bf16.msra.mxu0 0
        %267 = vmatprep.subr.bf16.mxu0 0
        %268 = vmatpush1.bf16.msra.mxu0 0
        %269 = vmatprep.subr.bf16.mxu0 0
        %270 = vmatpush1.bf16.msra.mxu0 0
        %271 = vmatprep.subr.bf16.mxu0 0
        %272 = vmatpush1.bf16.msra.mxu0 0
        %273 = vmatprep.subr.bf16.mxu0 0
        %274 = vmatpush1.bf16.msra.mxu0 0
        %275 = vmatprep.subr.bf16.mxu0 0
        %276 = vmatpush1.bf16.msra.mxu0 0
        %277 = vmatprep.subr.bf16.mxu0 0
        %278 = vmatpush1.bf16.msra.mxu0 0
        %279 = vmatprep.subr.bf16.mxu0 0
        %280 = vmatpush1.bf16.msra.mxu0 0
        %281 = vmatprep.subr.bf16.mxu0 0
        %282 = vmatpush1.bf16.msra.mxu0 0
        %283 = vmatprep.subr.bf16.mxu0 0
        %284 = vmatpush1.bf16.msra.mxu0 0
        %285 = vmatprep.subr.bf16.mxu0 0
        %286 = vmatpush1.bf16.msra.mxu0 0
        %287 = vmatprep.subr.bf16.mxu0 0
        %288 = vmatpush1.bf16.msra.mxu0 0
        %289 = vmatprep.subr.bf16.mxu0 0
        %290 = vmatpush1.bf16.msra.mxu0 0
        %291 = vmatprep.mubr.bf16.mxu0 0
        %292 = vmatmul.mubr.bf16.gmra.mrb[0].mxu0 %v257
        %v293 = vpop.f32.mrb[0].mxu0
        %v294 = vadd.f32 0.0, %v293
        %v295 = vpop.f32.mrb[0].mxu0
        %v296 = vpop.f32.mrb[0].mxu0
        %v297 = vpop.f32.mrb[0].mxu0
        %298 = vdwg.mxu0
        %v299 = vld [vmem:[%s231] sm:$0xff]
        %301 = vset.pattern.permute.xlu0 0
        %302 = vperm.xlu0 %301, %v299
        %v303 = vpop.permute.xlu0 %302
        %v305 = vmul.f32 %v294, %v303
        %vm306 = vcmask 130048
        %307 = vst.msk [vmem:[%s217] sm:$0xff] %vm306, %v305
        %309 = vrot.lane.b32.xlu0 %v305, 112
        %v310 = vpop.permute.xlu0 %309
        %vm312 = vcmask 7168
        %313 = vst.msk [vmem:[%s235] sm:$0xff] %vm312, %v310
        %s314 = sand.u32 %s101, 1
        %s315 = scalar_lea.sflag [#allocation4], %s314
        %s316 = sand.u32 %s101, 1
        %s317 = smul.addr %s316, 8
        %s318 = scalar_lea.vmem [#allocation5], %s317
        %p319 = scmp.lt.s32.totalorder %s20, 1
        %s320 = scalar_select %p319, %s20, 1
        %s321 = smul.addr %s320, 8
        %s322 = scalar_lea.vmem %s4, %s321
        // Predicated region
        $region37: #{tpu_custom_call.1} parent=31 // pred_check
          %p323 = pneg %p111
        $region38: #{tpu_custom_call.1} parent=31 // pred_check_branch
          %325 = sbr.rel (%p323) target = $region40
        $region39: #{tpu_custom_call.1} parent=31 // pred_region
          %s327 = ssub.s32 128, 128
          %328 = vsyncadd %s315, %s327
          %s329 = smul.addr %s20, 128
          %s330 = scalar_lea.hbm %s3, %s329
          %s332 = sshll.u32 %s318, 4
          %s333 = int_to_ptr.vmem [resolvable:$true] %s332
          %335 = dma.vmem_to_hbm [thread:$0]  %s333, 128, %s330, %s315
        $region40: #{tpu_custom_call.1} parent=31 // pred_fallthru
          _
        // Predicated region
        $region41: #{tpu_custom_call.1} parent=31 // pred_check
          %p336 = pneg %p137
        $region42: #{tpu_custom_call.1} parent=31 // pred_check_branch
          %338 = sbr.rel (%p336) target = $region44
        $region43: #{tpu_custom_call.1} parent=31 // pred_region
          _
        $region44: #{tpu_custom_call.1} parent=31 // pred_fallthru
          _
      $region32: #{tpu_custom_call.1} parent=5 // pred_fallthru
        _
      %p339 = scmp.le.s32.totalorder 2, %s15
      // Predicated region
      $region45: #{tpu_custom_call.1} parent=5 // pred_check
        %p340 = pneg %p339
      $region46: #{tpu_custom_call.1} parent=5 // pred_check_branch
        %342 = sbr.rel (%p340) target = $region48
      $region47: #{tpu_custom_call.1} parent=5 // pred_region
        %s343 = ssub.s32 %s15, 2
        // Predicated region
        $region49: #{tpu_custom_call.1} parent=47 // pred_check
          %p344 = pneg %p117
        $region50: #{tpu_custom_call.1} parent=47 // pred_check_branch
          %346 = sbr.rel (%p344) target = $region52
        $region51: #{tpu_custom_call.1} parent=47 // pred_region
          %s347 = sand.u32 %s102, 1
          %s348 = scalar_lea.sflag [#allocation4], %s347
          %s349 = sand.u32 %s102, 1
          %s350 = smul.addr %s349, 8
          %s351 = scalar_lea.vmem [#allocation5], %s350
          %352 = dma.done %s348, 128
        $region52: #{tpu_custom_call.1} parent=47 // pred_fallthru
          _
        // Predicated region
        $region53: #{tpu_custom_call.1} parent=47 // pred_check
          %p353 = pneg %p143
        $region54: #{tpu_custom_call.1} parent=47 // pred_check_branch
          %355 = sbr.rel (%p353) target = $region56
        $region55: #{tpu_custom_call.1} parent=47 // pred_region
          %p356 = scmp.lt.s32.totalorder %s21, 1
          %s357 = scalar_select %p356, %s21, 1
          %s358 = smul.addr %s357, 8
          %s359 = scalar_lea.vmem %s4, %s358
        $region56: #{tpu_custom_call.1} parent=47 // pred_fallthru
          _
      $region48: #{tpu_custom_call.1} parent=5 // pred_fallthru
        _
    $region6: #{tpu_custom_call.1} parent=1 // loop_footer
      %s19 = sadd.s32 1, %s15
    $region7: #{tpu_custom_call.1} parent=1 // loop_footer_branch
      %14 = sbr.rel target = $region3
    $region8: #{tpu_custom_call.1} parent=1 // loop_exit
      _
    %360 = vsyncpa [#allocation3], 1
    %s361 = scalar_lea.sflag [#allocation3], 1
    %362 = vsyncpa %s361, 1
    %363 = vsyncpa [#allocation4], 1
    %s364 = scalar_lea.sflag [#allocation4], 1
    %365 = vsyncpa %s364, 1

</llo_original>
